<compile_context>
chip_gen: v7x
topology: tpu7x:2x2x1
jax: 0.10.0
libtpu: 0.0.40
codegen_flags: <defaults>
</compile_context>

<pallas_src>
import functools

import jax
import jax.numpy as jnp
from jax.experimental import pallas as pl
from jax.experimental.pallas import tpu as pltpu


def _pooler_kernel(x_ref, w_ref, b_ref, o_ref):
    # x_ref: (TM, Hp)  pooled token vectors
    # w_ref: (Hp, TN)  weight tile in [in, out] layout -> plain matmul, no transpose
    # b_ref: (1, TN)   bias tile
    # o_ref: (TM, TN)  output tile
    y = jnp.dot(x_ref[...], w_ref[...], preferred_element_type=jnp.float32)
    y = y + b_ref[...].astype(jnp.float32)
    o_ref[...] = jnp.tanh(y).astype(o_ref.dtype)


@functools.lru_cache(maxsize=None)
def _vmem_limit_and_budget():
    """Per-generation scoped-VMEM limit to request + block budget to spend."""
    try:
        cap = int(pltpu.get_tpu_info().vmem_capacity_bytes)
    except Exception:  # query unavailable -> assume v7x per-core floor (64 MiB)
        cap = 64 * 1024 * 1024
    limit = min(cap * 3 // 4, 96 * 1024 * 1024)
    budget = min(limit * 4 // 5, 48 * 1024 * 1024)
    return limit, budget


@functools.lru_cache(maxsize=None)
def _num_tensorcores():
    """1 TensorCore/chip on v5e/v6e, 2 on v7x (device_kind heuristic)."""
    try:
        kind = jax.devices()[0].device_kind.lower()
        if "v7" in kind or "7x" in kind:
            return 2
    except Exception:
        pass
    return 1


def _choose_tiles(m_sub, sub, h_pad, x_size, w_size, o_size, budget, num_cores):
    """Pick (TM, TN) tiles and buffer depths from the per-generation budget."""
    # --- M tile: keep x fully resident unless it would eat the VMEM budget. --
    x_row_bytes = h_pad * x_size
    x_budget = min(budget // 3, 8 * 1024 * 1024)
    if m_sub * x_row_bytes <= x_budget:
        tm = m_sub
    else:
        tm = max(sub, (x_budget // x_row_bytes) // sub * sub)
    n_m = -(-m_sub // tm)
    m_pad = n_m * tm
    x_bufs = 1 if n_m == 1 else 2            # grid-invariant x -> single buffer
    rem = budget - x_bufs * tm * x_row_bytes

    # --- N tile: largest column slab of W_io whose buffers fit the rest. -----
    def w_tile_bytes(tn, bufs=2):
        return (bufs * h_pad * tn * w_size    # weight slab buffers
                + 2 * tm * tn * o_size        # output tile buffers
                + 2 * 8 * tn * w_size)        # (padded) bias tile buffers

    cands = [c for c in range(h_pad, 127, -128) if h_pad % c == 0]
    fitting = [c for c in cands if w_tile_bytes(c) <= rem] or [128]
    if num_cores <= 1 or h_pad < 4 * 128:
        tn = fitting[0]                       # fewest grid steps on a 1-TC chip
    else:
        # v7x: even tile count, >= 2 tiles per core, so both TCs stream and
        # the memory-bound work stays balanced with per-core double buffering.
        good = [c for c in fitting
                if (h_pad // c) >= 2 * num_cores and (h_pad // c) % num_cores == 0]
        ok = [c for c in fitting
              if (h_pad // c) > 1 and (h_pad // c) % num_cores == 0]
        multi = [c for c in fitting if (h_pad // c) >= num_cores]
        tn = (good or ok or multi or fitting)[0]
    n_n = h_pad // tn

    # Deepen the weight stream when there are many slabs and room is left.
    w_bufs = 3 if (n_n >= 4 and w_tile_bytes(tn, 3) <= rem) else 2
    return tm, m_pad, n_m, tn, n_n, x_bufs, w_bufs


def _bert_pooler_dim_impl(hidden_states, weight_io, bias, tokens):
    B, S, H = hidden_states.shape

    # Token gather (glue; jitted so it fuses around the pallas_call).
    if isinstance(tokens, (tuple, list)):
        token_tensor = hidden_states[:, jnp.asarray(list(tokens))]   # [B, T, H]
    else:
        token_tensor = hidden_states[:, tokens]                      # [B, H]
    out_shape = token_tensor.shape
    x2d = token_tensor.reshape(-1, H)
    M = x2d.shape[0]

    x_size = jnp.dtype(hidden_states.dtype).itemsize
    w_size = jnp.dtype(weight_io.dtype).itemsize
    o_size = x_size

    sub = max(8, 32 // x_size)                # dtype-native sublane packing
    m_sub = -(-M // sub) * sub
    h_pad = -(-H // 128) * 128

    limit, budget = _vmem_limit_and_budget()
    cores = _num_tensorcores()
    tm, m_pad, n_m, tn, n_n, x_bufs, w_bufs = _choose_tiles(
        m_sub, sub, h_pad, x_size, w_size, o_size, budget, cores)

    # Pad only what actually needs padding (no HxH copy when only M is padded).
    if h_pad != H:
        weight_io = jnp.pad(weight_io, ((0, h_pad - H), (0, h_pad - H)))
        bias = jnp.pad(bias, (0, h_pad - H))
    if m_pad != M or h_pad != H:
        x2d = jnp.pad(x2d, ((0, m_pad - M), (0, h_pad - H)))
    b2d = bias.reshape(1, h_pad)

    x_spec_kwargs = {"pipeline_mode": pl.Buffered(1)} if x_bufs == 1 else {}
    w_spec_kwargs = {"pipeline_mode": pl.Buffered(w_bufs)} if w_bufs != 2 else {}

    cost = pl.CostEstimate(
        flops=2 * m_pad * h_pad * h_pad,
        transcendentals=m_pad * h_pad,
        bytes_accessed=(h_pad * h_pad + h_pad) * w_size
        + m_pad * h_pad * (x_size + o_size),
    )

    out2d = pl.pallas_call(
        _pooler_kernel,
        out_shape=jax.ShapeDtypeStruct((m_pad, h_pad), hidden_states.dtype),
        grid_spec=pltpu.PrefetchScalarGridSpec(
            num_scalar_prefetch=0,
            grid=(n_m, n_n),
            in_specs=[
                pl.BlockSpec((tm, h_pad), lambda i, j: (i, 0), **x_spec_kwargs),
                pl.BlockSpec((h_pad, tn), lambda i, j: (0, j), **w_spec_kwargs),
                pl.BlockSpec((1, tn), lambda i, j: (0, j)),
            ],
            out_specs=pl.BlockSpec((tm, tn), lambda i, j: (i, j)),
        ),
        compiler_params=pltpu.CompilerParams(
            dimension_semantics=("parallel", "parallel"),
            vmem_limit_bytes=limit,
        ),
        cost_estimate=cost,
    )(x2d, weight_io, b2d)

    out2d = out2d[:M, :H]
    return out2d.reshape(out_shape)


_bert_pooler_dim_jit = jax.jit(_bert_pooler_dim_impl, static_argnames=("tokens",))


def bert_pooler_dim(hidden_states, weight_io, bias, tokens=0):
    """Pallas implementation of BertPoolerDim.forward.

    Args:
      hidden_states: [B, S, H] activations.
      weight_io: [H, H] Linear weight in [in, out] layout, i.e. the TRANSPOSE of
        the PyTorch nn.Linear weight.  Transpose once at parameter-load time.
      bias: [H] Linear bias.
      tokens: static int or list/tuple of ints — token position(s) to pool from.

    Returns:
      [B, H] if tokens is an int, else [B, len(tokens), H].
    """
    if isinstance(tokens, list):
        tokens = tuple(tokens)
    return _bert_pooler_dim_jit(hidden_states, weight_io, bias, tokens=tokens)


if __name__ == "__main__":
    # Small shapes consistent with the module: batch=2, seq=8, hidden=32.
    B, S, H = 2, 8, 32
    key = jax.random.PRNGKey(0)
    k_x, k_w, k_b = jax.random.split(key, 3)

    hidden_states = jax.random.normal(k_x, (B, S, H), dtype=jnp.float32)
    # Deterministic synthetic parameters in PyTorch [out, in] convention.
    weight = jax.random.normal(k_w, (H, H), dtype=jnp.float32) * 0.02
    bias = jax.random.normal(k_b, (H,), dtype=jnp.float32) * 0.02
    # One-time, parameter-load-time layout decision: store W as [in, out].
    weight_io = jnp.asarray(weight.T)

    # Default tokens=0 → pool the first token.
    out = bert_pooler_dim(hidden_states, weight_io, bias, tokens=0)
    out = jax.block_until_ready(out)

    ref = jnp.tanh(hidden_states[:, 0] @ weight.T + bias)
    assert out.shape == (B, H)
    assert jnp.allclose(out, ref, atol=1e-5, rtol=1e-5)

    # Also exercise the list-of-tokens path.
    out_multi = bert_pooler_dim(hidden_states, weight_io, bias, tokens=[0, 3])
    out_multi = jax.block_until_ready(out_multi)
    ref_multi = jnp.tanh(hidden_states[:, jnp.array([0, 3])] @ weight.T + bias)
    assert out_multi.shape == (B, 2, H)
    assert jnp.allclose(out_multi, ref_multi, atol=1e-5, rtol=1e-5)

    print("KERNEL_OK")
</pallas_src>

<mosaic_0001>
module attributes {stable_mosaic.version = 11 : i64} {
  func.func @_pooler_kernel(%arg0: i32, %arg1: i32, %arg2: memref<8x128xf32, #tpu.memory_space<vmem>>, %arg3: memref<128x128xf32, #tpu.memory_space<vmem>>, %arg4: memref<1x128xf32, #tpu.memory_space<vmem>>, %arg5: memref<8x128xf32, #tpu.memory_space<vmem>>) attributes {dimension_semantics = [#tpu.dimension_semantics<parallel>, #tpu.dimension_semantics<parallel>], iteration_bounds = array<i64: 1, 1>, scalar_prefetch = 0 : i64, scratch_operands = 0 : i64, tpu.core_type = #tpu.core_type<tc>, window_params = [{pipeline_mode = #tpu.pipeline_mode<synchronous>, transform_indices = @transform_0, window_bounds = array<i64: 8, 128>}, {transform_indices = @transform_1, window_bounds = array<i64: 128, 128>}, {transform_indices = @transform_2, window_bounds = array<i64: 1, 128>}, {transform_indices = @transform_3, window_bounds = array<i64: 8, 128>}]} {
    %c0 = arith.constant 0 : index
    %c0_0 = arith.constant 0 : index
    %0 = vector.load %arg2[%c0, %c0_0] : memref<8x128xf32, #tpu.memory_space<vmem>>, vector<8x128xf32>
    %c0_1 = arith.constant 0 : index
    %c0_2 = arith.constant 0 : index
    %1 = vector.load %arg3[%c0_1, %c0_2] : memref<128x128xf32, #tpu.memory_space<vmem>>, vector<128x128xf32>
    %cst = arith.constant dense<0.000000e+00> : vector<8x128xf32>
    %2 = tpu.matmul %0, %1, %cst {dimension_numbers = #tpu.dot_dimension_numbers<[1], [0], [0], [1], [0, 0, 1, 1], [], []>} : vector<8x128xf32>, vector<128x128xf32>, vector<8x128xf32> -> vector<8x128xf32>
    %c0_3 = arith.constant 0 : index
    %c0_4 = arith.constant 0 : index
    %3 = vector.load %arg4[%c0_3, %c0_4] : memref<1x128xf32, #tpu.memory_space<vmem>>, vector<1x128xf32>
    %4 = vector.broadcast %3 : vector<1x128xf32> to vector<8x128xf32>
    %5 = arith.addf %2, %4 : vector<8x128xf32>
    %6 = math.tanh %5 : vector<8x128xf32>
    %c0_5 = arith.constant 0 : index
    %c0_6 = arith.constant 0 : index
    %7 = vector.load %arg5[%c0_5, %c0_6] : memref<8x128xf32, #tpu.memory_space<vmem>>, vector<8x128xf32>
    tpu.vector_store %arg5[%c0_5, %c0_6], %6 {strides = array<i32>} : memref<8x128xf32, #tpu.memory_space<vmem>>, vector<8x128xf32>,
    return
  }
  func.func @transform_0(%arg0: i32, %arg1: i32) -> (i32, i32) {
    %c0_i32 = arith.constant 0 : i32
    %c0_i32_0 = arith.constant 0 : i32
    return %arg0, %c0_i32 : i32, i32
  }
  func.func @transform_1(%arg0: i32, %arg1: i32) -> (i32, i32) {
    %c0_i32 = arith.constant 0 : i32
    %c0_i32_0 = arith.constant 0 : i32
    return %c0_i32, %arg1 : i32, i32
  }
  func.func @transform_2(%arg0: i32, %arg1: i32) -> (i32, i32) {
    %c0_i32 = arith.constant 0 : i32
    %c0_i32_0 = arith.constant 0 : i32
    return %c0_i32, %arg1 : i32, i32
  }
  func.func @transform_3(%arg0: i32, %arg1: i32) -> (i32, i32) {
    %c0_i32 = arith.constant 0 : i32
    return %arg0, %arg1 : i32, i32
  }
}

</mosaic_0001>

<llo_original>
// kernel: _bert_pooler_dim_impl.1
$region0: #{_bert_pooler_dim_impl.1}
  #allocation0 [shape = 'u32[]', space=smem, size = 0x4, offset = 0x4, fixed_abs, tag = 'smem constant byte address 0x4 - core index']
  #allocation1 [shape = 'u32[144,128]{1,0:T(1,128)}', space=vmem, size = 0x12000, scoped, tag = 'internal scratch']
  %s0 = inlined_call_operand.vmem [shape: f32[8,128], index: 0, kind: input, shape index: {}]
  %s1 = inlined_call_operand.vmem [shape: f32[128,128], index: 1, kind: input, shape index: {}]
  %s2 = inlined_call_operand.vmem [shape: f32[1,128], index: 2, kind: input, shape index: {}]
  %s3 = inlined_call_operand.vmem [shape: f32[8,128], index: 3, kind: output, shape index: {}]
  %s4 = sld [smem:[#allocation0]]
  $region22: #{_bert_pooler_dim_impl.1} parent=0
    _
  %s6 = ssub.s32 1, %s4
  %s7 = scalar_select 0, %s6, %s4
  // Predicated region
  $region2: #{_bert_pooler_dim_impl.1} parent=0 // pred_check
    _
  $region3: #{_bert_pooler_dim_impl.1} parent=0 // pred_check_branch
    %9 = sbr.rel (0) target = $region5
  $region4: #{_bert_pooler_dim_impl.1} parent=0 // pred_region
    _
  $region5: #{_bert_pooler_dim_impl.1} parent=0 // pred_fallthru
    _
  // Predicated region
  $region6: #{_bert_pooler_dim_impl.1} parent=0 // pred_check
    _
  $region7: #{_bert_pooler_dim_impl.1} parent=0 // pred_check_branch
    %11 = sbr.rel (0) target = $region9
  $region8: #{_bert_pooler_dim_impl.1} parent=0 // pred_region
    _
  $region9: #{_bert_pooler_dim_impl.1} parent=0 // pred_fallthru
    _
  // Predicated region
  $region10: #{_bert_pooler_dim_impl.1} parent=0 // pred_check
    _
  $region11: #{_bert_pooler_dim_impl.1} parent=0 // pred_check_branch
    %13 = sbr.rel (0) target = $region13
  $region12: #{_bert_pooler_dim_impl.1} parent=0 // pred_region
    _
  $region13: #{_bert_pooler_dim_impl.1} parent=0 // pred_fallthru
    _
  %v14 = vld [vmem:[%s0] sm:$0xff]
  %v15 = vld [vmem:[%s1] sm:$0xff]
  %v16 = vld [vmem:[%s1 + $0x8] sm:$0xff]
  %v17 = vld [vmem:[%s1 + $0x10] sm:$0xff]
  %v18 = vld [vmem:[%s1 + $0x18] sm:$0xff]
  %v19 = vld [vmem:[%s1 + $0x20] sm:$0xff]
  %v20 = vld [vmem:[%s1 + $0x28] sm:$0xff]
  %v21 = vld [vmem:[%s1 + $0x30] sm:$0xff]
  %v22 = vld [vmem:[%s1 + $0x38] sm:$0xff]
  %v23 = vld [vmem:[%s1 + $0x40] sm:$0xff]
  %v24 = vld [vmem:[%s1 + $0x48] sm:$0xff]
  %v25 = vld [vmem:[%s1 + $0x50] sm:$0xff]
  %v26 = vld [vmem:[%s1 + $0x58] sm:$0xff]
  %v27 = vld [vmem:[%s1 + $0x60] sm:$0xff]
  %v28 = vld [vmem:[%s1 + $0x68] sm:$0xff]
  %v29 = vld [vmem:[%s1 + $0x70] sm:$0xff]
  %v30 = vld [vmem:[%s1 + $0x78] sm:$0xff]
  %v31 = vld [vmem:[%s2] sm:$0x1]
  %v33 = vlaneseq
  %v34 = vshrl.u32 %v33, 7
  %v35 = vsub.s32 0, %v34
  %v36 = vrot.slane %v31, %v35
  %38 = vmatprep.subr.mxu0 0.0
  %39 = vmatpush1.msra.mxu0 %v15
  %40 = vmatprep.subr.mxu0 0.0
  %41 = vmatpush1.msra.mxu0 %v16
  %42 = vmatprep.subr.mxu0 0.0
  %43 = vmatpush1.msra.mxu0 %v17
  %44 = vmatprep.subr.mxu0 0.0
  %45 = vmatpush1.msra.mxu0 %v18
  %46 = vmatprep.subr.mxu0 0.0
  %47 = vmatpush1.msra.mxu0 %v19
  %48 = vmatprep.subr.mxu0 0.0
  %49 = vmatpush1.msra.mxu0 %v20
  %50 = vmatprep.subr.mxu0 0.0
  %51 = vmatpush1.msra.mxu0 %v21
  %52 = vmatprep.subr.mxu0 0.0
  %53 = vmatpush1.msra.mxu0 %v22
  %54 = vmatprep.subr.mxu0 0.0
  %55 = vmatpush1.msra.mxu0 %v23
  %56 = vmatprep.subr.mxu0 0.0
  %57 = vmatpush1.msra.mxu0 %v24
  %58 = vmatprep.subr.mxu0 0.0
  %59 = vmatpush1.msra.mxu0 %v25
  %60 = vmatprep.subr.mxu0 0.0
  %61 = vmatpush1.msra.mxu0 %v26
  %62 = vmatprep.subr.mxu0 0.0
  %63 = vmatpush1.msra.mxu0 %v27
  %64 = vmatprep.subr.mxu0 0.0
  %65 = vmatpush1.msra.mxu0 %v28
  %66 = vmatprep.subr.mxu0 0.0
  %67 = vmatpush1.msra.mxu0 %v29
  %68 = vmatprep.subr.mxu0 0.0
  %69 = vmatpush1.msra.mxu0 %v30
  %70 = vmatprep.subr.mxu0 0.0
  %71 = vmatpush1.msra.mxu0 0.0
  %72 = vmatprep.subr.mxu0 0.0
  %73 = vmatpush1.msra.mxu0 0.0
  %74 = vmatprep.subr.mxu0 0.0
  %75 = vmatpush1.msra.mxu0 0.0
  %76 = vmatprep.subr.mxu0 0.0
  %77 = vmatpush1.msra.mxu0 0.0
  %78 = vmatprep.subr.mxu0 0.0
  %79 = vmatpush1.msra.mxu0 0.0
  %80 = vmatprep.subr.mxu0 0.0
  %81 = vmatpush1.msra.mxu0 0.0
  %82 = vmatprep.subr.mxu0 0.0
  %83 = vmatpush1.msra.mxu0 0.0
  %84 = vmatprep.subr.mxu0 0.0
  %85 = vmatpush1.msra.mxu0 0.0
  %86 = vmatprep.subr.mxu0 0.0
  %87 = vmatpush1.msra.mxu0 0.0
  %88 = vmatprep.subr.mxu0 0.0
  %89 = vmatpush1.msra.mxu0 0.0
  %90 = vmatprep.subr.mxu0 0.0
  %91 = vmatpush1.msra.mxu0 0.0
  %92 = vmatprep.subr.mxu0 0.0
  %93 = vmatpush1.msra.mxu0 0.0
  %94 = vmatprep.subr.mxu0 0.0
  %95 = vmatpush1.msra.mxu0 0.0
  %96 = vmatprep.subr.mxu0 0.0
  %97 = vmatpush1.msra.mxu0 0.0
  %98 = vmatprep.subr.mxu0 0.0
  %99 = vmatpush1.msra.mxu0 0.0
  %100 = vmatprep.subr.mxu0 0.0
  %101 = vmatpush1.msra.mxu0 0.0
  %102 = vmatprep.mubr.f32.mxu0 0.0
  %103 = vmatmul.mubr.f32.gmra.mrb[0].mxu0 %v14
  %v104 = vpop.f32.mrb[0].mxu0
  %v105 = vadd.f32 %v36, %v104
  %v106 = vpop.f32.mrb[0].mxu0
  %107 = vdwg.mxu0
  %v108 = vtanh.pop %v105
  %109 = vst [vmem:[%s3] sm:$0xff] %v108
  // Predicated region
  $region14: #{_bert_pooler_dim_impl.1} parent=0 // pred_check
    _
  $region15: #{_bert_pooler_dim_impl.1} parent=0 // pred_check_branch
    %111 = sbr.rel (0) target = $region17
  $region16: #{_bert_pooler_dim_impl.1} parent=0 // pred_region
    _
  $region17: #{_bert_pooler_dim_impl.1} parent=0 // pred_fallthru
    _
  // Predicated region
  $region18: #{_bert_pooler_dim_impl.1} parent=0 // pred_check
    _
  $region19: #{_bert_pooler_dim_impl.1} parent=0 // pred_check_branch
    %113 = sbr.rel (0) target = $region21
  $region20: #{_bert_pooler_dim_impl.1} parent=0 // pred_region
    _
  $region21: #{_bert_pooler_dim_impl.1} parent=0 // pred_fallthru
    _

</llo_original>
